<compile_context>
chip_gen: v5e
topology: v5e:2x2
jax: 0.10.0
libtpu: 0.0.40
codegen_flags: <defaults>
</compile_context>

<pallas_src>
import functools

import jax
import jax.numpy as jnp
import numpy as np
from jax import lax
from jax.experimental import pallas as pl
from jax.experimental.pallas import tpu as pltpu


def _round_up(v, m):
    return (v + m - 1) // m * m


# ---------------------------------------------------------------------------
# Kernel 1: node-parallel precompute   iou0 = x @ W_iou + b_iou ; state0 = [h0 | 0]
# ---------------------------------------------------------------------------
def precompute_kernel(x_ref, w_iou_ref, b_iou_ref, w_lin_ref, b_lin_ref,
                      iou0_ref, state0_ref):
    x = x_ref[...]
    iou0_ref[...] = (jnp.dot(x, w_iou_ref[...], preferred_element_type=jnp.float32)
                     + b_iou_ref[...])
    h0 = jnp.dot(x, w_lin_ref[...], preferred_element_type=jnp.float32) + b_lin_ref[...]
    state0_ref[...] = jnp.concatenate([h0, jnp.zeros_like(h0)], axis=-1)


# ---------------------------------------------------------------------------
# Kernel 2: sequential topological propagation over per-level slabs
# ---------------------------------------------------------------------------
def prop_kernel(lvl_off_ref, lvl_cnt_ref, adj_ref, iou0_ref, state0_ref,
                u_iou_ref, u_f_w_ref, u_f_b_ref,
                h_out_ref, state_ref, *, num_levels, hp, lmax):
    # state layout: [:, :hp] = h, [:, hp:] = f*c  with f = sigmoid(U_f h + b_f)
    state_ref[...] = state0_ref[...]

    # hoist loop invariants out of the hot loop
    u_iou = u_iou_ref[...]
    u_f_w = u_f_w_ref[...]
    u_f_b = u_f_b_ref[...]
    row_ids = lax.broadcasted_iota(jnp.int32, (lmax, 1), 0)

    # num_levels is host-static and small -> fully unrolled level loop
    for l in range(1, num_levels + 1):
        off = pl.multiple_of(lvl_off_ref[l], 16)
        cnt = lvl_cnt_ref[l]

        state = state_ref[...]                                   # (N, 2hp) f32
        adj_slab = adj_ref[pl.ds(off, lmax), :]                  # (lmax, N) bf16 0/1
        # fused child aggregation: one MXU pass -> [sum_children h | sum_children f*c]
        agg = jnp.dot(adj_slab, state, preferred_element_type=jnp.float32)
        h_tild = agg[:, :hp]
        c_agg = agg[:, hp:]

        iou = (iou0_ref[pl.ds(off, lmax), :]                     # b_iou already folded in
               + jnp.dot(h_tild, u_iou, preferred_element_type=jnp.float32))
        i = jax.nn.sigmoid(iou[:, :hp])
        o = jax.nn.sigmoid(iou[:, hp:2 * hp])
        u = jnp.tanh(iou[:, 2 * hp:])
        c_new = i * u + c_agg
        h_new = o * jnp.tanh(c_new)
        # this node's future contribution to its own parent: f * c
        fc_new = jax.nn.sigmoid(
            jnp.dot(h_new, u_f_w, preferred_element_type=jnp.float32) + u_f_b) * c_new

        # only the first `cnt` rows of the slab belong to this level
        mask = row_ids < cnt
        old = state_ref[pl.ds(off, lmax), :]
        new = jnp.concatenate([h_new, fc_new], axis=-1)
        state_ref[pl.ds(off, lmax), :] = jnp.where(mask, new, old)

    h_out_ref[...] = state_ref[:, :hp]


# ---------------------------------------------------------------------------
# Host-side graph / weight preprocessing
# ---------------------------------------------------------------------------
def _pad2d(a, rows, cols):
    a = np.asarray(a, np.float32)
    out = np.zeros((rows, cols), np.float32)
    out[:a.shape[0], :a.shape[1]] = a
    return out


def _pad_gatewise(a, rows, hp, h_size):
    # (r, 3*h_size) -> (rows, 3*hp); each gate block padded independently so the
    # i / o / u slices stay 128-lane aligned inside the kernel.
    a = np.asarray(a, np.float32)
    gates = [a[:, g * h_size:(g + 1) * h_size] for g in range(3)]
    return np.concatenate([_pad2d(g, rows, hp) for g in gates], axis=1)


def build_level_layout(levels_np, block_align=16):
    levels_np = np.asarray(levels_np, np.int32)
    num_levels = int(levels_np.max()) if levels_np.size else 0
    order = []
    offsets = np.zeros(max(num_levels + 1, 1), np.int32)
    counts = np.zeros(max(num_levels + 1, 1), np.int32)
    for l in range(num_levels + 1):
        nodes_l = np.nonzero(levels_np == l)[0]
        offsets[l] = len(order)
        counts[l] = nodes_l.size
        order.extend(nodes_l.tolist())
        order.extend([-1] * ((-len(order)) % block_align))
    if num_levels >= 1:
        lmax = int(max(_round_up(int(c), block_align)
                       for c in counts[1:num_levels + 1]))
    else:
        lmax = block_align
    required = len(order)
    for l in range(1, num_levels + 1):
        required = max(required, int(offsets[l]) + lmax)
    n_pad = _round_up(max(required, 128), 128)
    return order, offsets, counts, num_levels, lmax, n_pad


def tree_lstm_forward(x, children, levels_np, params, h_size):
    # NOTE: graph structure (levels / children) must be host-concrete; this wrapper
    # is not jittable over graph structure (same limitation as the original design).
    n, x_size = x.shape
    hp = _round_up(h_size, 128)
    xp = _round_up(x_size, 128)

    order, lvl_off, lvl_cnt, num_levels, lmax, n_pad = build_level_layout(levels_np)

    # sorted-position -> original-node gather index (index n = dummy all-zero row)
    gidx = np.full(n_pad, n, np.int32)
    pos_of = np.zeros(n, np.int32)
    for pos, node in enumerate(order):
        if node >= 0:
            gidx[pos] = node
            pos_of[node] = pos

    # level-sorted, lane-padded inputs
    x_ext = jnp.concatenate([jnp.asarray(x, jnp.float32),
                             jnp.zeros((1, x_size), jnp.float32)], axis=0)
    x_pad = jnp.zeros((n_pad, xp), jnp.float32).at[:, :x_size].set(
        x_ext[jnp.asarray(gidx)])

    adj_np = np.zeros((n_pad, n_pad), np.float32)
    for parent, chs in children.items():
        for ch in chs:
            adj_np[pos_of[parent], pos_of[ch]] = 1.0
    adj = jnp.asarray(adj_np).astype(jnp.bfloat16)          # 0/1 exact in bf16

    # gate-wise padded weights (pre-transposed to (in, out))
    w_iou_p = jnp.asarray(_pad_gatewise(params['w_iou_t'], xp, hp, h_size))
    u_iou_p = jnp.asarray(_pad_gatewise(params['u_iou_t'], hp, hp, h_size))
    b_iou_p = jnp.asarray(_pad_gatewise(params['b_iou'], 1, hp, h_size))
    u_f_w_p = jnp.asarray(_pad2d(params['u_f_w_t'], hp, hp))
    u_f_b_p = jnp.asarray(_pad2d(params['u_f_b'], 1, hp))
    w_lin_p = jnp.asarray(_pad2d(params['w_lin_t'], xp, hp))
    b_lin_p = jnp.asarray(_pad2d(params['b_lin'], 1, hp))

    # --- stage 1: embarrassingly parallel per-node precompute (pipelined, megacore) ---
    tile = 128
    iou0, state0 = pl.pallas_call(
        precompute_kernel,
        out_shape=(jax.ShapeDtypeStruct((n_pad, 3 * hp), jnp.float32),
                   jax.ShapeDtypeStruct((n_pad, 2 * hp), jnp.float32)),
        grid=(n_pad // tile,),
        in_specs=[pl.BlockSpec((tile, xp), lambda i: (i, 0)),
                  pl.BlockSpec((xp, 3 * hp), lambda i: (0, 0)),
                  pl.BlockSpec((1, 3 * hp), lambda i: (0, 0)),
                  pl.BlockSpec((xp, hp), lambda i: (0, 0)),
                  pl.BlockSpec((1, hp), lambda i: (0, 0))],
        out_specs=(pl.BlockSpec((tile, 3 * hp), lambda i: (i, 0)),
                   pl.BlockSpec((tile, 2 * hp), lambda i: (i, 0))),
        compiler_params=pltpu.CompilerParams(dimension_semantics=("parallel",)),
    )(x_pad, w_iou_p, b_iou_p, w_lin_p, b_lin_p)

    # --- stage 2: sequential topological propagation ---
    resident = (adj.size * 2
                + (iou0.size + 2 * state0.size + n_pad * hp) * 4
                + (u_iou_p.size + u_f_w_p.size + u_f_b_p.size) * 4)
    vmem_limit = int(min(100 << 20, max(2 * resident + (4 << 20), 16 << 20)))

    smem = pl.BlockSpec(memory_space=pltpu.MemorySpace.SMEM)
    vmem = pl.BlockSpec(memory_space=pltpu.MemorySpace.VMEM)
    kernel = functools.partial(prop_kernel, num_levels=num_levels, hp=hp, lmax=lmax)
    h_sorted = pl.pallas_call(
        kernel,
        out_shape=jax.ShapeDtypeStruct((n_pad, hp), jnp.float32),
        in_specs=[smem, smem, vmem, vmem, vmem, vmem, vmem, vmem],
        out_specs=vmem,
        scratch_shapes=[pltpu.VMEM((n_pad, 2 * hp), jnp.float32)],
        compiler_params=pltpu.CompilerParams(vmem_limit_bytes=vmem_limit),
    )(jnp.asarray(lvl_off), jnp.asarray(lvl_cnt), adj, iou0, state0,
      u_iou_p, u_f_w_p, u_f_b_p)

    # un-permute and strip lane padding outside the kernel (keeps in-kernel stores dense)
    return h_sorted[jnp.asarray(pos_of)][:, :h_size]


# ---------------------------------------------------------------------------
# Pure numpy per-node reference emulating dgl.prop_nodes_topo
# ---------------------------------------------------------------------------
def reference_forward(x, children_list, levels, params, h_size):
    def sigmoid(z):
        return 1.0 / (1.0 + np.exp(-z))

    x = np.asarray(x, np.float64)
    w_iou = np.asarray(params['w_iou_t'], np.float64)
    u_iou = np.asarray(params['u_iou_t'], np.float64)
    b_iou = np.asarray(params['b_iou'], np.float64)
    u_f_w = np.asarray(params['u_f_w_t'], np.float64)
    u_f_b = np.asarray(params['u_f_b'], np.float64)
    w_lin = np.asarray(params['w_lin_t'], np.float64)
    b_lin = np.asarray(params['b_lin'], np.float64)

    n = x.shape[0]
    iou0 = x @ w_iou
    h = x @ w_lin + b_lin
    c = np.zeros((n, h_size))
    for l in range(1, int(max(levels)) + 1):
        h_new, c_new = h.copy(), c.copy()
        for node in range(n):
            if levels[node] != l:
                continue
            ch = children_list[node]
            hc, cc = h[ch], c[ch]
            h_tild = hc.sum(0)
            f = sigmoid(hc @ u_f_w + u_f_b)
            c_agg = (f * cc).sum(0)
            iou = iou0[node] + h_tild @ u_iou + b_iou[0]
            i = sigmoid(iou[:h_size])
            o = sigmoid(iou[h_size:2 * h_size])
            u = np.tanh(iou[2 * h_size:])
            c_new[node] = i * u + c_agg
            h_new[node] = o * np.tanh(c_new[node])
        h, c = h_new, c_new
    return h


if __name__ == "__main__":
    x_size, h_size = 16, 32
    n = 8
    # small tree: leaves 0..4; node 5 <- {0,1}; node 6 <- {2,3,4}; root 7 <- {5,6}
    children = {5: [0, 1], 6: [2, 3, 4], 7: [5, 6]}
    levels_np = np.array([0, 0, 0, 0, 0, 1, 1, 2], dtype=np.int32)

    key = jax.random.PRNGKey(0)
    ks = jax.random.split(key, 7)
    scale = 0.1
    params = {
        'w_iou_t': jax.random.normal(ks[0], (x_size, 3 * h_size), jnp.float32) * scale,
        'u_iou_t': jax.random.normal(ks[1], (h_size, 3 * h_size), jnp.float32) * scale,
        'b_iou':   jnp.zeros((1, 3 * h_size), jnp.float32),       # nn.Parameter zeros
        'u_f_w_t': jax.random.normal(ks[2], (h_size, h_size), jnp.float32) * scale,
        'u_f_b':   jax.random.normal(ks[3], (1, h_size), jnp.float32) * scale,
        'w_lin_t': jax.random.normal(ks[4], (x_size, h_size), jnp.float32) * scale,
        'b_lin':   jax.random.normal(ks[5], (1, h_size), jnp.float32) * scale,
    }
    x = jax.random.normal(ks[6], (n, x_size), jnp.float32)

    h = tree_lstm_forward(x, children, levels_np, params, h_size)
    h = jax.block_until_ready(h)

    children_list = [children.get(i, []) for i in range(n)]
    h_ref = reference_forward(np.asarray(x), children_list, levels_np, params, h_size)
    err = float(np.max(np.abs(np.asarray(h) - h_ref)))
    assert np.allclose(np.asarray(h), h_ref, atol=1e-4), err

    print("KERNEL_OK")
</pallas_src>

<mosaic_0001>
module attributes {stable_mosaic.version = 11 : i64} {
  func.func @precompute_kernel(%arg0: i32, %arg1: memref<128x128xf32, #tpu.memory_space<vmem>>, %arg2: memref<128x384xf32, #tpu.memory_space<vmem>>, %arg3: memref<1x384xf32, #tpu.memory_space<vmem>>, %arg4: memref<128x128xf32, #tpu.memory_space<vmem>>, %arg5: memref<1x128xf32, #tpu.memory_space<vmem>>, %arg6: memref<128x384xf32, #tpu.memory_space<vmem>>, %arg7: memref<128x256xf32, #tpu.memory_space<vmem>>) attributes {dimension_semantics = [#tpu.dimension_semantics<parallel>], iteration_bounds = array<i64: 1>, scalar_prefetch = 0 : i64, scratch_operands = 0 : i64, tpu.core_type = #tpu.core_type<tc>, window_params = [{transform_indices = @transform_0, window_bounds = array<i64: 128, 128>}, {pipeline_mode = #tpu.pipeline_mode<synchronous>, transform_indices = @transform_1, window_bounds = array<i64: 128, 384>}, {pipeline_mode = #tpu.pipeline_mode<synchronous>, transform_indices = @transform_2, window_bounds = array<i64: 1, 384>}, {pipeline_mode = #tpu.pipeline_mode<synchronous>, transform_indices = @transform_3, window_bounds = array<i64: 128, 128>}, {pipeline_mode = #tpu.pipeline_mode<synchronous>, transform_indices = @transform_4, window_bounds = array<i64: 1, 128>}, {transform_indices = @transform_5, window_bounds = array<i64: 128, 384>}, {transform_indices = @transform_6, window_bounds = array<i64: 128, 256>}]} {
    %c0 = arith.constant 0 : index
    %c0_0 = arith.constant 0 : index
    %0 = vector.load %arg1[%c0, %c0_0] : memref<128x128xf32, #tpu.memory_space<vmem>>, vector<128x128xf32>
    %c0_1 = arith.constant 0 : index
    %c0_2 = arith.constant 0 : index
    %1 = vector.load %arg2[%c0_1, %c0_2] : memref<128x384xf32, #tpu.memory_space<vmem>>, vector<128x384xf32>
    %cst = arith.constant dense<0.000000e+00> : vector<128x384xf32>
    %2 = tpu.matmul %0, %1, %cst {dimension_numbers = #tpu.dot_dimension_numbers<[1], [0], [0], [1], [0, 0, 1, 1], [], []>} : vector<128x128xf32>, vector<128x384xf32>, vector<128x384xf32> -> vector<128x384xf32>
    %c0_3 = arith.constant 0 : index
    %c0_4 = arith.constant 0 : index
    %3 = vector.load %arg3[%c0_3, %c0_4] : memref<1x384xf32, #tpu.memory_space<vmem>>, vector<1x384xf32>
    %4 = vector.broadcast %3 : vector<1x384xf32> to vector<128x384xf32>
    %5 = arith.addf %2, %4 : vector<128x384xf32>
    %c0_5 = arith.constant 0 : index
    %c0_6 = arith.constant 0 : index
    %6 = vector.load %arg6[%c0_5, %c0_6] : memref<128x384xf32, #tpu.memory_space<vmem>>, vector<128x384xf32>
    tpu.vector_store %arg6[%c0_5, %c0_6], %5 {strides = array<i32>} : memref<128x384xf32, #tpu.memory_space<vmem>>, vector<128x384xf32>,
    %c0_7 = arith.constant 0 : index
    %c0_8 = arith.constant 0 : index
    %7 = vector.load %arg4[%c0_7, %c0_8] : memref<128x128xf32, #tpu.memory_space<vmem>>, vector<128x128xf32>
    %cst_9 = arith.constant dense<0.000000e+00> : vector<128x128xf32>
    %8 = tpu.matmul %0, %7, %cst_9 {dimension_numbers = #tpu.dot_dimension_numbers<[1], [0], [0], [1], [0, 0, 1, 1], [], []>} : vector<128x128xf32>, vector<128x128xf32>, vector<128x128xf32> -> vector<128x128xf32>
    %c0_10 = arith.constant 0 : index
    %c0_11 = arith.constant 0 : index
    %9 = vector.load %arg5[%c0_10, %c0_11] : memref<1x128xf32, #tpu.memory_space<vmem>>, vector<1x128xf32>
    %10 = vector.broadcast %9 : vector<1x128xf32> to vector<128x128xf32>
    %11 = arith.addf %8, %10 : vector<128x128xf32>
    %cst_12 = arith.constant 0.000000e+00 : f32
    %12 = vector.broadcast %cst_12 : f32 to vector<128x128xf32>
    %13 = tpu.concatenate %11, %12 in 1 : vector<128x128xf32>, vector<128x128xf32> -> vector<128x256xf32>
    %c0_13 = arith.constant 0 : index
    %c0_14 = arith.constant 0 : index
    %14 = vector.load %arg7[%c0_13, %c0_14] : memref<128x256xf32, #tpu.memory_space<vmem>>, vector<128x256xf32>
    tpu.vector_store %arg7[%c0_13, %c0_14], %13 {strides = array<i32>} : memref<128x256xf32, #tpu.memory_space<vmem>>, vector<128x256xf32>,
    return
  }
  func.func @transform_0(%arg0: i32) -> (i32, i32) {
    %c0_i32 = arith.constant 0 : i32
    %c0_i32_0 = arith.constant 0 : i32
    return %arg0, %c0_i32 : i32, i32
  }
  func.func @transform_1(%arg0: i32) -> (i32, i32) {
    %c0_i32 = arith.constant 0 : i32
    %c0_i32_0 = arith.constant 0 : i32
    %c0_i32_1 = arith.constant 0 : i32
    return %c0_i32, %c0_i32_0 : i32, i32
  }
  func.func @transform_2(%arg0: i32) -> (i32, i32) {
    %c0_i32 = arith.constant 0 : i32
    %c0_i32_0 = arith.constant 0 : i32
    %c0_i32_1 = arith.constant 0 : i32
    return %c0_i32, %c0_i32_0 : i32, i32
  }
  func.func @transform_3(%arg0: i32) -> (i32, i32) {
    %c0_i32 = arith.constant 0 : i32
    %c0_i32_0 = arith.constant 0 : i32
    %c0_i32_1 = arith.constant 0 : i32
    return %c0_i32, %c0_i32_0 : i32, i32
  }
  func.func @transform_4(%arg0: i32) -> (i32, i32) {
    %c0_i32 = arith.constant 0 : i32
    %c0_i32_0 = arith.constant 0 : i32
    %c0_i32_1 = arith.constant 0 : i32
    return %c0_i32, %c0_i32_0 : i32, i32
  }
  func.func @transform_5(%arg0: i32) -> (i32, i32) {
    %c0_i32 = arith.constant 0 : i32
    %c0_i32_0 = arith.constant 0 : i32
    return %arg0, %c0_i32 : i32, i32
  }
  func.func @transform_6(%arg0: i32) -> (i32, i32) {
    %c0_i32 = arith.constant 0 : i32
    %c0_i32_0 = arith.constant 0 : i32
    return %arg0, %c0_i32 : i32, i32
  }
}

</mosaic_0001>

<llo_original>
// kernel: tpu_custom_call.1
$region0: #{tpu_custom_call.1}
  #allocation0 [shape = 'u32[]', space=smem, size = 0x4, offset = 0x4, fixed_abs, tag = 'smem constant byte address 0x4 - core index']
  #allocation1 [shape = 'u32[72,128]{1,0:T(1,128)}', space=vmem, size = 0x9000, scoped, tag = 'internal scratch']
  %s0 = inlined_call_operand.hbm [shape: f32[128,128], index: 0, kind: input, shape index: {}]
  %s1 = inlined_call_operand.hbm [shape: f32[128,384], index: 1, kind: input, shape index: {}]
  %s2 = inlined_call_operand.hbm [shape: f32[1,384], index: 2, kind: input, shape index: {}]
  %s3 = inlined_call_operand.hbm [shape: f32[128,128], index: 3, kind: input, shape index: {}]
  %s4 = inlined_call_operand.vmem [shape: f32[1,128], index: 4, kind: input, shape index: {}]
  %s5 = inlined_call_operand.hbm [shape: f32[128,384], index: 5, kind: output, shape index: {0}]
  %s6 = inlined_call_operand.hbm [shape: f32[128,256], index: 6, kind: output, shape index: {1}]
  %7 = xla_tuple %s5, %s6
  %s8 = sld [smem:[#allocation0]]
  $region54: #{tpu_custom_call.1} parent=0
    _
  %s10 = ssub.s32 1, %s8
  %s11 = scalar_select 0, %s10, %s8
  $region1: #{tpu_custom_call.1} parent=0
    #allocation2 [shape = 'u8[65536]{0}', space=vmem, size = 0x10000, scoped, tag = 'input window, operand 0, single buffered']
    #allocation3 [shape = 's32[1]{0}', space=sflag, size = 0x4, scoped, tag = 'scoped memory for tpu_custom_call.1']
    #allocation4 [shape = 's32[1]{0}', space=sflag, size = 0x4, scoped, tag = 'scoped memory for tpu_custom_call.1']
    #allocation5 [shape = 'u8[196608]{0}', space=vmem, size = 0x30000, scoped, tag = 'input window, operand 1, single buffered']
    #allocation6 [shape = 's32[1]{0}', space=sflag, size = 0x4, scoped, tag = 'scoped memory for tpu_custom_call.1']
    #allocation7 [shape = 'u8[1536]{0}', space=vmem, size = 0x800, scoped, tag = 'input window, operand 2, single buffered']
    #allocation8 [shape = 'u8[65536]{0}', space=vmem, size = 0x10000, scoped, tag = 'input window, operand 3, single buffered']
    #allocation9 [shape = 's32[1]{0}', space=sflag, size = 0x4, scoped, tag = 'scoped memory for tpu_custom_call.1']
    #allocation10 [shape = 'u8[196608]{0}', space=vmem, size = 0x30000, scoped, tag = 'output window, operand 0, single buffered']
    #allocation11 [shape = 'u8[131072]{0}', space=vmem, size = 0x20000, scoped, tag = 'output window, operand 1, single buffered']
    #allocation12 [shape = 's32[1]{0}', space=sflag, size = 0x4, scoped, tag = 'scoped memory for tpu_custom_call.1']
    %12 = vsyncpa [#allocation3], 0
    %13 = vsyncpa [#allocation6], 0
    %14 = vsyncpa [#allocation9], 0
    %15 = vsyncpa [#allocation4], 0
    %16 = vsyncpa [#allocation12], 0
    // Predicated region
    $region2: #{tpu_custom_call.1} parent=1 // pred_check
      _
    $region3: #{tpu_custom_call.1} parent=1 // pred_check_branch
      %18 = sbr.rel (0) target = $region5
    $region4: #{tpu_custom_call.1} parent=1 // pred_region
      %20 = vsyncadd [#allocation3], 0
      %s21 = sshll.u32 %s0, 4
      %s22 = int_to_ptr.hbm [resolvable:$true] %s21
      %s23 = sshll.u32 [#allocation2], 4
      %s24 = int_to_ptr.vmem [resolvable:$true] %s23
      %29 = dma.hbm_to_vmem [thread:$0]  %s22, 2048, %s24, [#allocation3], 128, 128, 8
    $region5: #{tpu_custom_call.1} parent=1 // pred_fallthru
      _
    // Predicated region
    $region6: #{tpu_custom_call.1} parent=1 // pred_check
      _
    $region7: #{tpu_custom_call.1} parent=1 // pred_check_branch
      %31 = sbr.rel (0) target = $region9
    $region8: #{tpu_custom_call.1} parent=1 // pred_region
      %33 = vsyncadd [#allocation6], 0
      %s34 = sshll.u32 %s1, 4
      %s35 = int_to_ptr.hbm [resolvable:$true] %s34
      %s36 = sshll.u32 [#allocation5], 4
      %s37 = int_to_ptr.vmem [resolvable:$true] %s36
      %42 = dma.hbm_to_vmem [thread:$0]  %s35, 6144, %s37, [#allocation6], 384, 384, 24
    $region9: #{tpu_custom_call.1} parent=1 // pred_fallthru
      _
    // Predicated region
    $region10: #{tpu_custom_call.1} parent=1 // pred_check
      _
    $region11: #{tpu_custom_call.1} parent=1 // pred_check_branch
      %44 = sbr.rel (0) target = $region13
    $region12: #{tpu_custom_call.1} parent=1 // pred_region
      %46 = vsyncadd [#allocation6], 0
      %s48 = sshll.u32 %s2, 4
      %s49 = int_to_ptr.hbm [resolvable:$true] %s48
      %s50 = sshll.u32 [#allocation7], 4
      %s51 = int_to_ptr.vmem [resolvable:$true] %s50
      %53 = dma.hbm_to_vmem [thread:$0]  %s49, 48, %s51, [#allocation6]
    $region13: #{tpu_custom_call.1} parent=1 // pred_fallthru
      _
    // Predicated region
    $region14: #{tpu_custom_call.1} parent=1 // pred_check
      _
    $region15: #{tpu_custom_call.1} parent=1 // pred_check_branch
      %55 = sbr.rel (0) target = $region17
    $region16: #{tpu_custom_call.1} parent=1 // pred_region
      %57 = vsyncadd [#allocation9], 0
      %s58 = sshll.u32 %s3, 4
      %s59 = int_to_ptr.hbm [resolvable:$true] %s58
      %s60 = sshll.u32 [#allocation8], 4
      %s61 = int_to_ptr.vmem [resolvable:$true] %s60
      %66 = dma.hbm_to_vmem [thread:$0]  %s59, 2048, %s61, [#allocation9], 128, 128, 8
    $region17: #{tpu_custom_call.1} parent=1 // pred_fallthru
      _
    // Predicated region
    $region18: #{tpu_custom_call.1} parent=1 // pred_check
      _
    $region19: #{tpu_custom_call.1} parent=1 // pred_check_branch
      %68 = sbr.rel (0) target = $region21
    $region20: #{tpu_custom_call.1} parent=1 // pred_region
      _
    $region21: #{tpu_custom_call.1} parent=1 // pred_fallthru
      _
    // Predicated region
    $region22: #{tpu_custom_call.1} parent=1 // pred_check
      _
    $region23: #{tpu_custom_call.1} parent=1 // pred_check_branch
      %70 = sbr.rel (0) target = $region25
    $region24: #{tpu_custom_call.1} parent=1 // pred_region
      %72 = dma.done [#allocation3], 2048
    $region25: #{tpu_custom_call.1} parent=1 // pred_fallthru
      _
    // Predicated region
    $region26: #{tpu_custom_call.1} parent=1 // pred_check
      _
    $region27: #{tpu_custom_call.1} parent=1 // pred_check_branch
      %74 = sbr.rel (0) target = $region29
    $region28: #{tpu_custom_call.1} parent=1 // pred_region
      %76 = dma.done [#allocation6], 6144
    $region29: #{tpu_custom_call.1} parent=1 // pred_fallthru
      _
    // Predicated region
    $region30: #{tpu_custom_call.1} parent=1 // pred_check
      _
    $region31: #{tpu_custom_call.1} parent=1 // pred_check_branch
      %78 = sbr.rel (0) target = $region33
    $region32: #{tpu_custom_call.1} parent=1 // pred_region
      %80 = dma.done [#allocation6], 48
    $region33: #{tpu_custom_call.1} parent=1 // pred_fallthru
      _
    // Predicated region
    $region34: #{tpu_custom_call.1} parent=1 // pred_check
      _
    $region35: #{tpu_custom_call.1} parent=1 // pred_check_branch
      %82 = sbr.rel (0) target = $region37
    $region36: #{tpu_custom_call.1} parent=1 // pred_region
      %84 = dma.done [#allocation9], 2048
    $region37: #{tpu_custom_call.1} parent=1 // pred_fallthru
      _
    %v85 = vld [vmem:[#allocation2] sm:$0xff]
    %v86 = vld [vmem:[#allocation2 + $0x8] sm:$0xff]
    %v87 = vld [vmem:[#allocation2 + $0x10] sm:$0xff]
    %v88 = vld [vmem:[#allocation2 + $0x18] sm:$0xff]
    %v89 = vld [vmem:[#allocation2 + $0x20] sm:$0xff]
    %v90 = vld [vmem:[#allocation2 + $0x28] sm:$0xff]
    %v91 = vld [vmem:[#allocation2 + $0x30] sm:$0xff]
    %v92 = vld [vmem:[#allocation2 + $0x38] sm:$0xff]
    %v93 = vld [vmem:[#allocation2 + $0x40] sm:$0xff]
    %v94 = vld [vmem:[#allocation2 + $0x48] sm:$0xff]
    %v95 = vld [vmem:[#allocation2 + $0x50] sm:$0xff]
    %v96 = vld [vmem:[#allocation2 + $0x58] sm:$0xff]
    %v97 = vld [vmem:[#allocation2 + $0x60] sm:$0xff]
    %v98 = vld [vmem:[#allocation2 + $0x68] sm:$0xff]
    %v99 = vld [vmem:[#allocation2 + $0x70] sm:$0xff]
    %v100 = vld [vmem:[#allocation2 + $0x78] sm:$0xff]
    %v101 = vld [vmem:[#allocation5] sm:$0xff]
    %v102 = vld [vmem:[#allocation5 + $0x8] sm:$0xff]
    %v103 = vld [vmem:[#allocation5 + $0x10] sm:$0xff]
    %v104 = vld [vmem:[#allocation5 + $0x18] sm:$0xff]
    %v105 = vld [vmem:[#allocation5 + $0x20] sm:$0xff]
    %v106 = vld [vmem:[#allocation5 + $0x28] sm:$0xff]
    %v107 = vld [vmem:[#allocation5 + $0x30] sm:$0xff]
    %v108 = vld [vmem:[#allocation5 + $0x38] sm:$0xff]
    %v109 = vld [vmem:[#allocation5 + $0x40] sm:$0xff]
    %v110 = vld [vmem:[#allocation5 + $0x48] sm:$0xff]
    %v111 = vld [vmem:[#allocation5 + $0x50] sm:$0xff]
    %v112 = vld [vmem:[#allocation5 + $0x58] sm:$0xff]
    %v113 = vld [vmem:[#allocation5 + $0x60] sm:$0xff]
    %v114 = vld [vmem:[#allocation5 + $0x68] sm:$0xff]
    %v115 = vld [vmem:[#allocation5 + $0x70] sm:$0xff]
    %v116 = vld [vmem:[#allocation5 + $0x78] sm:$0xff]
    %v117 = vld [vmem:[#allocation5 + $0x80] sm:$0xff]
    %v118 = vld [vmem:[#allocation5 + $0x88] sm:$0xff]
    %v119 = vld [vmem:[#allocation5 + $0x90] sm:$0xff]
    %v120 = vld [vmem:[#allocation5 + $0x98] sm:$0xff]
    %v121 = vld [vmem:[#allocation5 + $0xa0] sm:$0xff]
    %v122 = vld [vmem:[#allocation5 + $0xa8] sm:$0xff]
    %v123 = vld [vmem:[#allocation5 + $0xb0] sm:$0xff]
    %v124 = vld [vmem:[#allocation5 + $0xb8] sm:$0xff]
    %v125 = vld [vmem:[#allocation5 + $0xc0] sm:$0xff]
    %v126 = vld [vmem:[#allocation5 + $0xc8] sm:$0xff]
    %v127 = vld [vmem:[#allocation5 + $0xd0] sm:$0xff]
    %v128 = vld [vmem:[#allocation5 + $0xd8] sm:$0xff]
    %v129 = vld [vmem:[#allocation5 + $0xe0] sm:$0xff]
    %v130 = vld [vmem:[#allocation5 + $0xe8] sm:$0xff]
    %v131 = vld [vmem:[#allocation5 + $0xf0] sm:$0xff]
    %v132 = vld [vmem:[#allocation5 + $0xf8] sm:$0xff]
    %v133 = vld [vmem:[#allocation5 + $0x100] sm:$0xff]
    %v134 = vld [vmem:[#allocation5 + $0x108] sm:$0xff]
    %v135 = vld [vmem:[#allocation5 + $0x110] sm:$0xff]
    %v136 = vld [vmem:[#allocation5 + $0x118] sm:$0xff]
    %v137 = vld [vmem:[#allocation5 + $0x120] sm:$0xff]
    %v138 = vld [vmem:[#allocation5 + $0x128] sm:$0xff]
    %v139 = vld [vmem:[#allocation5 + $0x130] sm:$0xff]
    %v140 = vld [vmem:[#allocation5 + $0x138] sm:$0xff]
    %v141 = vld [vmem:[#allocation5 + $0x140] sm:$0xff]
    %v142 = vld [vmem:[#allocation5 + $0x148] sm:$0xff]
    %v143 = vld [vmem:[#allocation5 + $0x150] sm:$0xff]
    %v144 = vld [vmem:[#allocation5 + $0x158] sm:$0xff]
    %v145 = vld [vmem:[#allocation5 + $0x160] sm:$0xff]
    %v146 = vld [vmem:[#allocation5 + $0x168] sm:$0xff]
    %v147 = vld [vmem:[#allocation5 + $0x170] sm:$0xff]
    %v148 = vld [vmem:[#allocation5 + $0x178] sm:$0xff]
    %v149 = vld [vmem:[#allocation7] sm:$0x7]
    %v151 = vperm.slane %v149, 0
    %v152 = vperm.slane %v149, 1
    %v153 = vperm.slane %v149, 2
    %157 = vmatpush.msra.mxu0 %v146
    %158 = vmatpush.msra.mxu0 %v143
    %159 = vmatpush.msra.mxu0 %v140
    %160 = vmatpush.msra.mxu0 %v137
    %161 = vmatpush.msra.mxu0 %v134
    %162 = vmatpush.msra.mxu0 %v131
    %163 = vmatpush.msra.mxu0 %v128
    %164 = vmatpush.msra.mxu0 %v125
    %165 = vmatpush.msra.mxu0 %v122
    %166 = vmatpush.msra.mxu0 %v119
    %167 = vmatpush.msra.mxu0 %v116
    %168 = vmatpush.msra.mxu0 %v113
    %169 = vmatpush.msra.mxu0 %v110
    %170 = vmatpush.msra.mxu0 %v107
    %171 = vmatpush.msra.mxu0 %v104
    %172 = vmatpush.msra.mxu0 %v101
    %173 = vmatmul.f32.gmra.mxu0 %v85
    %v174 = vpop.f32.mrf.mxu0
    %v175 = vadd.f32 %v151, %v174
    %176 = vmatmul.f32.gmra.mxu0 %v86
    %v177 = vpop.f32.mrf.mxu0
    %v178 = vadd.f32 %v151, %v177
    %179 = vmatmul.f32.gmra.mxu0 %v87
    %v180 = vpop.f32.mrf.mxu0
    %v181 = vadd.f32 %v151, %v180
    %182 = vmatmul.f32.gmra.mxu0 %v88
    %v183 = vpop.f32.mrf.mxu0
    %v184 = vadd.f32 %v151, %v183
    %185 = vmatmul.f32.gmra.mxu0 %v89
    %v186 = vpop.f32.mrf.mxu0
    %v187 = vadd.f32 %v151, %v186
    %188 = vmatmul.f32.gmra.mxu0 %v90
    %v189 = vpop.f32.mrf.mxu0
    %v190 = vadd.f32 %v151, %v189
    %191 = vmatmul.f32.gmra.mxu0 %v91
    %v192 = vpop.f32.mrf.mxu0
    %v193 = vadd.f32 %v151, %v192
    %194 = vmatmul.f32.gmra.mxu0 %v92
    %v195 = vpop.f32.mrf.mxu0
    %v196 = vadd.f32 %v151, %v195
    %197 = vmatmul.f32.gmra.mxu0 %v93
    %v198 = vpop.f32.mrf.mxu0
    %v199 = vadd.f32 %v151, %v198
    %200 = vmatmul.f32.gmra.mxu0 %v94
    %v201 = vpop.f32.mrf.mxu0
    %v202 = vadd.f32 %v151, %v201
    %203 = vmatmul.f32.gmra.mxu0 %v95
    %v204 = vpop.f32.mrf.mxu0
    %v205 = vadd.f32 %v151, %v204
    %206 = vmatmul.f32.gmra.mxu0 %v96
    %v207 = vpop.f32.mrf.mxu0
    %v208 = vadd.f32 %v151, %v207
    %209 = vmatmul.f32.gmra.mxu0 %v97
    %v210 = vpop.f32.mrf.mxu0
    %v211 = vadd.f32 %v151, %v210
    %212 = vmatmul.f32.gmra.mxu0 %v98
    %v213 = vpop.f32.mrf.mxu0
    %v214 = vadd.f32 %v151, %v213
    %215 = vmatmul.f32.gmra.mxu0 %v99
    %v216 = vpop.f32.mrf.mxu0
    %v217 = vadd.f32 %v151, %v216
    %218 = vmatmul.f32.gmra.mxu0 %v100
    %v219 = vpop.f32.mrf.mxu0
    %v220 = vadd.f32 %v151, %v219
    %221 = vdwg.mxu0
    %222 = vmatpush.msra.mxu0 %v147
    %223 = vmatpush.msra.mxu0 %v144
    %224 = vmatpush.msra.mxu0 %v141
    %225 = vmatpush.msra.mxu0 %v138
    %226 = vmatpush.msra.mxu0 %v135
    %227 = vmatpush.msra.mxu0 %v132
    %228 = vmatpush.msra.mxu0 %v129
    %229 = vmatpush.msra.mxu0 %v126
    %230 = vmatpush.msra.mxu0 %v123
    %231 = vmatpush.msra.mxu0 %v120
    %232 = vmatpush.msra.mxu0 %v117
    %233 = vmatpush.msra.mxu0 %v114
    %234 = vmatpush.msra.mxu0 %v111
    %235 = vmatpush.msra.mxu0 %v108
    %236 = vmatpush.msra.mxu0 %v105
    %237 = vmatpush.msra.mxu0 %v102
    %238 = vmatmul.f32.gmra.mxu0 %v85
    %v239 = vpop.f32.mrf.mxu0
    %v240 = vadd.f32 %v152, %v239
    %241 = vmatmul.f32.gmra.mxu0 %v86
    %v242 = vpop.f32.mrf.mxu0
    %v243 = vadd.f32 %v152, %v242
    %244 = vmatmul.f32.gmra.mxu0 %v87
    %v245 = vpop.f32.mrf.mxu0
    %v246 = vadd.f32 %v152, %v245
    %247 = vmatmul.f32.gmra.mxu0 %v88
    %v248 = vpop.f32.mrf.mxu0
    %v249 = vadd.f32 %v152, %v248
    %250 = vmatmul.f32.gmra.mxu0 %v89
    %v251 = vpop.f32.mrf.mxu0
    %v252 = vadd.f32 %v152, %v251
    %253 = vmatmul.f32.gmra.mxu0 %v90
    %v254 = vpop.f32.mrf.mxu0
    %v255 = vadd.f32 %v152, %v254
    %256 = vmatmul.f32.gmra.mxu0 %v91
    %v257 = vpop.f32.mrf.mxu0
    %v258 = vadd.f32 %v152, %v257
    %259 = vmatmul.f32.gmra.mxu0 %v92
    %v260 = vpop.f32.mrf.mxu0
    %v261 = vadd.f32 %v152, %v260
    %262 = vmatmul.f32.gmra.mxu0 %v93
    %v263 = vpop.f32.mrf.mxu0
    %v264 = vadd.f32 %v152, %v263
    %265 = vmatmul.f32.gmra.mxu0 %v94
    %v266 = vpop.f32.mrf.mxu0
    %v267 = vadd.f32 %v152, %v266
    %268 = vmatmul.f32.gmra.mxu0 %v95
    %v269 = vpop.f32.mrf.mxu0
    %v270 = vadd.f32 %v152, %v269
    %271 = vmatmul.f32.gmra.mxu0 %v96
    %v272 = vpop.f32.mrf.mxu0
    %v273 = vadd.f32 %v152, %v272
    %274 = vmatmul.f32.gmra.mxu0 %v97
    %v275 = vpop.f32.mrf.mxu0
    %v276 = vadd.f32 %v152, %v275
    %277 = vmatmul.f32.gmra.mxu0 %v98
    %v278 = vpop.f32.mrf.mxu0
    %v279 = vadd.f32 %v152, %v278
    %280 = vmatmul.f32.gmra.mxu0 %v99
    %v281 = vpop.f32.mrf.mxu0
    %v282 = vadd.f32 %v152, %v281
    %283 = vmatmul.f32.gmra.mxu0 %v100
    %v284 = vpop.f32.mrf.mxu0
    %v285 = vadd.f32 %v152, %v284
    %286 = vdwg.mxu0
    %287 = vmatpush.msra.mxu0 %v148
    %288 = vmatpush.msra.mxu0 %v145
    %289 = vmatpush.msra.mxu0 %v142
    %290 = vmatpush.msra.mxu0 %v139
    %291 = vmatpush.msra.mxu0 %v136
    %292 = vmatpush.msra.mxu0 %v133
    %293 = vmatpush.msra.mxu0 %v130
    %294 = vmatpush.msra.mxu0 %v127
    %295 = vmatpush.msra.mxu0 %v124
    %296 = vmatpush.msra.mxu0 %v121
    %297 = vmatpush.msra.mxu0 %v118
    %298 = vmatpush.msra.mxu0 %v115
    %299 = vmatpush.msra.mxu0 %v112
    %300 = vmatpush.msra.mxu0 %v109
    %301 = vmatpush.msra.mxu0 %v106
    %302 = vmatpush.msra.mxu0 %v103
    %303 = vmatmul.f32.gmra.mxu0 %v85
    %v304 = vpop.f32.mrf.mxu0
    %v305 = vadd.f32 %v153, %v304
    %306 = vmatmul.f32.gmra.mxu0 %v86
    %v307 = vpop.f32.mrf.mxu0
    %v308 = vadd.f32 %v153, %v307
    %309 = vmatmul.f32.gmra.mxu0 %v87
    %v310 = vpop.f32.mrf.mxu0
    %v311 = vadd.f32 %v153, %v310
    %312 = vmatmul.f32.gmra.mxu0 %v88
    %v313 = vpop.f32.mrf.mxu0
    %v314 = vadd.f32 %v153, %v313
    %315 = vmatmul.f32.gmra.mxu0 %v89
    %v316 = vpop.f32.mrf.mxu0
    %v317 = vadd.f32 %v153, %v316
    %318 = vmatmul.f32.gmra.mxu0 %v90
    %v319 = vpop.f32.mrf.mxu0
    %v320 = vadd.f32 %v153, %v319
    %321 = vmatmul.f32.gmra.mxu0 %v91
    %v322 = vpop.f32.mrf.mxu0
    %v323 = vadd.f32 %v153, %v322
    %324 = vmatmul.f32.gmra.mxu0 %v92
    %v325 = vpop.f32.mrf.mxu0
    %v326 = vadd.f32 %v153, %v325
    %327 = vmatmul.f32.gmra.mxu0 %v93
    %v328 = vpop.f32.mrf.mxu0
    %v329 = vadd.f32 %v153, %v328
    %330 = vmatmul.f32.gmra.mxu0 %v94
    %v331 = vpop.f32.mrf.mxu0
    %v332 = vadd.f32 %v153, %v331
    %333 = vmatmul.f32.gmra.mxu0 %v95
    %v334 = vpop.f32.mrf.mxu0
    %v335 = vadd.f32 %v153, %v334
    %336 = vmatmul.f32.gmra.mxu0 %v96
    %v337 = vpop.f32.mrf.mxu0
    %v338 = vadd.f32 %v153, %v337
    %339 = vmatmul.f32.gmra.mxu0 %v97
    %v340 = vpop.f32.mrf.mxu0
    %v341 = vadd.f32 %v153, %v340
    %342 = vmatmul.f32.gmra.mxu0 %v98
    %v343 = vpop.f32.mrf.mxu0
    %v344 = vadd.f32 %v153, %v343
    %345 = vmatmul.f32.gmra.mxu0 %v99
    %v346 = vpop.f32.mrf.mxu0
    %v347 = vadd.f32 %v153, %v346
    %348 = vmatmul.f32.gmra.mxu0 %v100
    %v349 = vpop.f32.mrf.mxu0
    %v350 = vadd.f32 %v153, %v349
    %351 = vdwg.mxu0
    %352 = vst [vmem:[#allocation10] sm:$0xff] %v175
    %353 = vst [vmem:[#allocation10 + $0x8] sm:$0xff] %v240
    %354 = vst [vmem:[#allocation10 + $0x10] sm:$0xff] %v305
    %355 = vst [vmem:[#allocation10 + $0x18] sm:$0xff] %v178
    %356 = vst [vmem:[#allocation10 + $0x20] sm:$0xff] %v243
    %357 = vst [vmem:[#allocation10 + $0x28] sm:$0xff] %v308
    %358 = vst [vmem:[#allocation10 + $0x30] sm:$0xff] %v181
    %359 = vst [vmem:[#allocation10 + $0x38] sm:$0xff] %v246
    %360 = vst [vmem:[#allocation10 + $0x40] sm:$0xff] %v311
    %361 = vst [vmem:[#allocation10 + $0x48] sm:$0xff] %v184
    %362 = vst [vmem:[#allocation10 + $0x50] sm:$0xff] %v249
    %363 = vst [vmem:[#allocation10 + $0x58] sm:$0xff] %v314
    %364 = vst [vmem:[#allocation10 + $0x60] sm:$0xff] %v187
    %365 = vst [vmem:[#allocation10 + $0x68] sm:$0xff] %v252
    %366 = vst [vmem:[#allocation10 + $0x70] sm:$0xff] %v317
    %367 = vst [vmem:[#allocation10 + $0x78] sm:$0xff] %v190
    %368 = vst [vmem:[#allocation10 + $0x80] sm:$0xff] %v255
    %369 = vst [vmem:[#allocation10 + $0x88] sm:$0xff] %v320
    %370 = vst [vmem:[#allocation10 + $0x90] sm:$0xff] %v193
    %371 = vst [vmem:[#allocation10 + $0x98] sm:$0xff] %v258
    %372 = vst [vmem:[#allocation10 + $0xa0] sm:$0xff] %v323
    %373 = vst [vmem:[#allocation10 + $0xa8] sm:$0xff] %v196
    %374 = vst [vmem:[#allocation10 + $0xb0] sm:$0xff] %v261
    %375 = vst [vmem:[#allocation10 + $0xb8] sm:$0xff] %v326
    %376 = vst [vmem:[#allocation10 + $0xc0] sm:$0xff] %v199
    %377 = vst [vmem:[#allocation10 + $0xc8] sm:$0xff] %v264
    %378 = vst [vmem:[#allocation10 + $0xd0] sm:$0xff] %v329
    %379 = vst [vmem:[#allocation10 + $0xd8] sm:$0xff] %v202
    %380 = vst [vmem:[#allocation10 + $0xe0] sm:$0xff] %v267
    %381 = vst [vmem:[#allocation10 + $0xe8] sm:$0xff] %v332
    %382 = vst [vmem:[#allocation10 + $0xf0] sm:$0xff] %v205
    %383 = vst [vmem:[#allocation10 + $0xf8] sm:$0xff] %v270
    %384 = vst [vmem:[#allocation10 + $0x100] sm:$0xff] %v335
    %385 = vst [vmem:[#allocation10 + $0x108] sm:$0xff] %v208
    %386 = vst [vmem:[#allocation10 + $0x110] sm:$0xff] %v273
    %387 = vst [vmem:[#allocation10 + $0x118] sm:$0xff] %v338
    %388 = vst [vmem:[#allocation10 + $0x120] sm:$0xff] %v211
    %389 = vst [vmem:[#allocation10 + $0x128] sm:$0xff] %v276
    %390 = vst [vmem:[#allocation10 + $0x130] sm:$0xff] %v341
    %391 = vst [vmem:[#allocation10 + $0x138] sm:$0xff] %v214
    %392 = vst [vmem:[#allocation10 + $0x140] sm:$0xff] %v279
    %393 = vst [vmem:[#allocation10 + $0x148] sm:$0xff] %v344
    %394 = vst [vmem:[#allocation10 + $0x150] sm:$0xff] %v217
    %395 = vst [vmem:[#allocation10 + $0x158] sm:$0xff] %v282
    %396 = vst [vmem:[#allocation10 + $0x160] sm:$0xff] %v347
    %397 = vst [vmem:[#allocation10 + $0x168] sm:$0xff] %v220
    %398 = vst [vmem:[#allocation10 + $0x170] sm:$0xff] %v285
    %399 = vst [vmem:[#allocation10 + $0x178] sm:$0xff] %v350
    %v400 = vld [vmem:[#allocation8] sm:$0xff]
    %v401 = vld [vmem:[#allocation8 + $0x8] sm:$0xff]
    %v402 = vld [vmem:[#allocation8 + $0x10] sm:$0xff]
    %v403 = vld [vmem:[#allocation8 + $0x18] sm:$0xff]
    %v404 = vld [vmem:[#allocation8 + $0x20] sm:$0xff]
    %v405 = vld [vmem:[#allocation8 + $0x28] sm:$0xff]
    %v406 = vld [vmem:[#allocation8 + $0x30] sm:$0xff]
    %v407 = vld [vmem:[#allocation8 + $0x38] sm:$0xff]
    %v408 = vld [vmem:[#allocation8 + $0x40] sm:$0xff]
    %v409 = vld [vmem:[#allocation8 + $0x48] sm:$0xff]
    %v410 = vld [vmem:[#allocation8 + $0x50] sm:$0xff]
    %v411 = vld [vmem:[#allocation8 + $0x58] sm:$0xff]
    %v412 = vld [vmem:[#allocation8 + $0x60] sm:$0xff]
    %v413 = vld [vmem:[#allocation8 + $0x68] sm:$0xff]
    %v414 = vld [vmem:[#allocation8 + $0x70] sm:$0xff]
    %v415 = vld [vmem:[#allocation8 + $0x78] sm:$0xff]
    %v416 = vld [vmem:[%s4] sm:$0x1]
    %v418 = vperm.slane %v416, 0
    %420 = vmatpush.msra.mxu0 %v415
    %421 = vmatpush.msra.mxu0 %v414
    %422 = vmatpush.msra.mxu0 %v413
    %423 = vmatpush.msra.mxu0 %v412
    %424 = vmatpush.msra.mxu0 %v411
    %425 = vmatpush.msra.mxu0 %v410
    %426 = vmatpush.msra.mxu0 %v409
    %427 = vmatpush.msra.mxu0 %v408
    %428 = vmatpush.msra.mxu0 %v407
    %429 = vmatpush.msra.mxu0 %v406
    %430 = vmatpush.msra.mxu0 %v405
    %431 = vmatpush.msra.mxu0 %v404
    %432 = vmatpush.msra.mxu0 %v403
    %433 = vmatpush.msra.mxu0 %v402
    %434 = vmatpush.msra.mxu0 %v401
    %435 = vmatpush.msra.mxu0 %v400
    %436 = vmatmul.f32.gmra.mxu0 %v85
    %v437 = vpop.f32.mrf.mxu0
    %v438 = vadd.f32 %v418, %v437
    %439 = vmatmul.f32.gmra.mxu0 %v86
    %v440 = vpop.f32.mrf.mxu0
    %v441 = vadd.f32 %v418, %v440
    %442 = vmatmul.f32.gmra.mxu0 %v87
    %v443 = vpop.f32.mrf.mxu0
    %v444 = vadd.f32 %v418, %v443
    %445 = vmatmul.f32.gmra.mxu0 %v88
    %v446 = vpop.f32.mrf.mxu0
    %v447 = vadd.f32 %v418, %v446
    %448 = vmatmul.f32.gmra.mxu0 %v89
    %v449 = vpop.f32.mrf.mxu0
    %v450 = vadd.f32 %v418, %v449
    %451 = vmatmul.f32.gmra.mxu0 %v90
    %v452 = vpop.f32.mrf.mxu0
    %v453 = vadd.f32 %v418, %v452
    %454 = vmatmul.f32.gmra.mxu0 %v91
    %v455 = vpop.f32.mrf.mxu0
    %v456 = vadd.f32 %v418, %v455
    %457 = vmatmul.f32.gmra.mxu0 %v92
    %v458 = vpop.f32.mrf.mxu0
    %v459 = vadd.f32 %v418, %v458
    %460 = vmatmul.f32.gmra.mxu0 %v93
    %v461 = vpop.f32.mrf.mxu0
    %v462 = vadd.f32 %v418, %v461
    %463 = vmatmul.f32.gmra.mxu0 %v94
    %v464 = vpop.f32.mrf.mxu0
    %v465 = vadd.f32 %v418, %v464
    %466 = vmatmul.f32.gmra.mxu0 %v95
    %v467 = vpop.f32.mrf.mxu0
    %v468 = vadd.f32 %v418, %v467
    %469 = vmatmul.f32.gmra.mxu0 %v96
    %v470 = vpop.f32.mrf.mxu0
    %v471 = vadd.f32 %v418, %v470
    %472 = vmatmul.f32.gmra.mxu0 %v97
    %v473 = vpop.f32.mrf.mxu0
    %v474 = vadd.f32 %v418, %v473
    %475 = vmatmul.f32.gmra.mxu0 %v98
    %v476 = vpop.f32.mrf.mxu0
    %v477 = vadd.f32 %v418, %v476
    %478 = vmatmul.f32.gmra.mxu0 %v99
    %v479 = vpop.f32.mrf.mxu0
    %v480 = vadd.f32 %v418, %v479
    %481 = vmatmul.f32.gmra.mxu0 %v100
    %v482 = vpop.f32.mrf.mxu0
    %v483 = vadd.f32 %v418, %v482
    %484 = vdwg.mxu0
    %485 = vst [vmem:[#allocation11] sm:$0xff] %v438
    %486 = vst [vmem:[#allocation11 + $0x8] sm:$0xff] 0.0
    %487 = vst [vmem:[#allocation11 + $0x10] sm:$0xff] %v441
    %488 = vst [vmem:[#allocation11 + $0x18] sm:$0xff] 0.0
    %489 = vst [vmem:[#allocation11 + $0x20] sm:$0xff] %v444
    %490 = vst [vmem:[#allocation11 + $0x28] sm:$0xff] 0.0
    %491 = vst [vmem:[#allocation11 + $0x30] sm:$0xff] %v447
    %492 = vst [vmem:[#allocation11 + $0x38] sm:$0xff] 0.0
    %493 = vst [vmem:[#allocation11 + $0x40] sm:$0xff] %v450
    %494 = vst [vmem:[#allocation11 + $0x48] sm:$0xff] 0.0
    %495 = vst [vmem:[#allocation11 + $0x50] sm:$0xff] %v453
    %496 = vst [vmem:[#allocation11 + $0x58] sm:$0xff] 0.0
    %497 = vst [vmem:[#allocation11 + $0x60] sm:$0xff] %v456
    %498 = vst [vmem:[#allocation11 + $0x68] sm:$0xff] 0.0
    %499 = vst [vmem:[#allocation11 + $0x70] sm:$0xff] %v459
    %500 = vst [vmem:[#allocation11 + $0x78] sm:$0xff] 0.0
    %501 = vst [vmem:[#allocation11 + $0x80] sm:$0xff] %v462
    %502 = vst [vmem:[#allocation11 + $0x88] sm:$0xff] 0.0
    %503 = vst [vmem:[#allocation11 + $0x90] sm:$0xff] %v465
    %504 = vst [vmem:[#allocation11 + $0x98] sm:$0xff] 0.0
    %505 = vst [vmem:[#allocation11 + $0xa0] sm:$0xff] %v468
    %506 = vst [vmem:[#allocation11 + $0xa8] sm:$0xff] 0.0
    %507 = vst [vmem:[#allocation11 + $0xb0] sm:$0xff] %v471
    %508 = vst [vmem:[#allocation11 + $0xb8] sm:$0xff] 0.0
    %509 = vst [vmem:[#allocation11 + $0xc0] sm:$0xff] %v474
    %510 = vst [vmem:[#allocation11 + $0xc8] sm:$0xff] 0.0
    %511 = vst [vmem:[#allocation11 + $0xd0] sm:$0xff] %v477
    %512 = vst [vmem:[#allocation11 + $0xd8] sm:$0xff] 0.0
    %513 = vst [vmem:[#allocation11 + $0xe0] sm:$0xff] %v480
    %514 = vst [vmem:[#allocation11 + $0xe8] sm:$0xff] 0.0
    %515 = vst [vmem:[#allocation11 + $0xf0] sm:$0xff] %v483
    %516 = vst [vmem:[#allocation11 + $0xf8] sm:$0xff] 0.0
    // Predicated region
    $region38: #{tpu_custom_call.1} parent=1 // pred_check
      _
    $region39: #{tpu_custom_call.1} parent=1 // pred_check_branch
      %518 = sbr.rel (0) target = $region41
    $region40: #{tpu_custom_call.1} parent=1 // pred_region
      %520 = vsyncadd [#allocation4], 0
      %s521 = sshll.u32 [#allocation10], 4
      %s522 = int_to_ptr.vmem [resolvable:$true] %s521
      %s523 = sshll.u32 %s5, 4
      %s524 = int_to_ptr.hbm [resolvable:$true] %s523
      %529 = dma.vmem_to_hbm [thread:$0]  %s522, 6144, %s524, [#allocation4], 384, 384, 24
    $region41: #{tpu_custom_call.1} parent=1 // pred_fallthru
      _
    // Predicated region
    $region42: #{tpu_custom_call.1} parent=1 // pred_check
      _
    $region43: #{tpu_custom_call.1} parent=1 // pred_check_branch
      %531 = sbr.rel (0) target = $region45
    $region44: #{tpu_custom_call.1} parent=1 // pred_region
      %533 = vsyncadd [#allocation12], 0
      %s534 = sshll.u32 [#allocation11], 4
      %s535 = int_to_ptr.vmem [resolvable:$true] %s534
      %s536 = sshll.u32 %s6, 4
      %s537 = int_to_ptr.hbm [resolvable:$true] %s536
      %542 = dma.vmem_to_hbm [thread:$0]  %s535, 4096, %s537, [#allocation12], 256, 256, 16
    $region45: #{tpu_custom_call.1} parent=1 // pred_fallthru
      _
    // Predicated region
    $region46: #{tpu_custom_call.1} parent=1 // pred_check
      _
    $region47: #{tpu_custom_call.1} parent=1 // pred_check_branch
      %544 = sbr.rel (0) target = $region49
    $region48: #{tpu_custom_call.1} parent=1 // pred_region
      %546 = dma.done [#allocation4], 6144
    $region49: #{tpu_custom_call.1} parent=1 // pred_fallthru
      _
    // Predicated region
    $region50: #{tpu_custom_call.1} parent=1 // pred_check
      _
    $region51: #{tpu_custom_call.1} parent=1 // pred_check_branch
      %548 = sbr.rel (0) target = $region53
    $region52: #{tpu_custom_call.1} parent=1 // pred_region
      %550 = dma.done [#allocation12], 4096
    $region53: #{tpu_custom_call.1} parent=1 // pred_fallthru
      _
    %551 = vsyncpa [#allocation3], 1
    %552 = vsyncpa [#allocation6], 1
    %553 = vsyncpa [#allocation9], 1
    %554 = vsyncpa [#allocation4], 1
    %555 = vsyncpa [#allocation12], 1

</llo_original>
